<compile_context>
chip_gen: v7x
topology: tpu7x:2x2x1
jax: 0.10.0
libtpu: 0.0.40
codegen_flags: <defaults>
</compile_context>

<pallas_src>
import functools

import jax
import jax.numpy as jnp
from jax.experimental import pallas as pl
from jax.experimental.pallas import tpu as pltpu

_MIB = 1024 * 1024


def _rmsnorm_kernel(x_ref, w_ref, o_ref, *, eps, exact_dtype_rounding):
    # x_ref: (row_tile, dim) block in VMEM; w_ref: (1, dim) f32 (DMA'd once).
    x = x_ref[...]
    x_f32 = x.astype(jnp.float32)
    variance = jnp.mean(x_f32 * x_f32, axis=-1, keepdims=True)
    inv_rms = jax.lax.rsqrt(variance + eps)
    normed = x_f32 * inv_rms
    if exact_dtype_rounding:
        # Match torch exactly: (x_f32 * rsqrt(var+eps)).to(x.dtype), then the
        # multiply with the f32 weight promotes back to f32.
        normed = normed.astype(x.dtype).astype(jnp.float32)
    o_ref[...] = (normed * w_ref[...]).astype(o_ref.dtype)


def _round_up(x, m):
    return ((x + m - 1) // m) * m


def _sublane_multiple(dtype):
    # Sub-32-bit dtypes pack along sublanes: 8 rows f32, 16 bf16, 32 int8/fp8.
    itemsize = jnp.dtype(dtype).itemsize
    return max(8, 32 // max(itemsize, 1))


def _tpu_vmem_and_cores():
    """Returns (per-core VMEM bytes, TensorCores per chip) with safe fallback."""
    vmem = None
    try:
        vmem = getattr(pltpu.get_tpu_info(), "vmem_capacity_bytes", None)
    except Exception:
        vmem = None
    if vmem is not None and int(vmem) <= 64 * _MIB:
        # v7x: 64 MiB VMEM per TensorCore, 2 TensorCores per chip.
        return int(vmem), 2
    if vmem is None:
        # Unknown hardware: budget conservatively, assume a single core.
        return 64 * _MIB, 1
    return int(vmem), 1


def _choose_row_tile(rows, dim, in_dtype, out_dtype, tile_budget_bytes,
                     num_cores, requested=None, max_rows=4096):
    sub = _sublane_multiple(in_dtype)
    if rows <= sub:
        # Single full-extent block (block dim == array dim is always legal).
        return int(rows)

    if requested is not None:
        row_tile = int(requested)
    else:
        in_b = jnp.dtype(in_dtype).itemsize
        out_b = jnp.dtype(out_dtype).itemsize
        # Live VMEM per grid step: double-buffered in/out tiles plus ~2 f32
        # (row_tile, dim) temporaries (x_f32, normed) inside the kernel.
        bytes_per_row = 2 * dim * (in_b + out_b) + 2 * dim * 4
        row_tile = tile_budget_bytes // max(bytes_per_row, 1)
        row_tile = min(row_tile, max_rows)

    # Align down to the sublane packing of the input dtype.
    row_tile = max(sub, (int(row_tile) // sub) * sub)
    # Never exceed the sublane-aligned row count; the ragged tail block is
    # handled by Pallas (reads clamped, writes masked) — no wrapper padding.
    row_tile = min(row_tile, max(sub, (rows // sub) * sub))
    # On multi-TensorCore parts (v7x) make sure there are >= num_cores grid
    # steps so CORE_PARALLEL can shard the row axis across cores.
    if num_cores > 1 and row_tile * num_cores > rows:
        row_tile = max(sub, _round_up(pl.cdiv(rows, num_cores), sub))
    return int(row_tile)


def rmsnorm(x, weight, eps=1e-5, *, row_tile=None, out_dtype=None,
            tile_budget_bytes=None, vmem_limit_bytes=None,
            exact_dtype_rounding=True):
    """RMSNorm over the last axis of x, scaled by `weight` (shape [dim])."""
    orig_shape = x.shape
    dim = orig_shape[-1]
    rows = 1
    for s in orig_shape[:-1]:
        rows *= s

    # Default output dtype mirrors torch promotion: normed(x.dtype) * weight.
    # bf16 callers wanting bf16 output (less store traffic) pass out_dtype.
    if out_dtype is None:
        out_dtype = jnp.promote_types(x.dtype, weight.dtype)

    vmem_cap, num_cores = _tpu_vmem_and_cores()
    if vmem_limit_bytes is None:
        vmem_limit_bytes = 48 * _MIB if vmem_cap <= 64 * _MIB else 96 * _MIB
    if tile_budget_bytes is None:
        tile_budget_bytes = 18 * _MIB if vmem_cap <= 64 * _MIB else 64 * _MIB

    x2d = x.reshape(rows, dim)
    # Weight is tiny; cast to f32 once here so the kernel does no per-tile cast.
    w2d = weight.astype(jnp.float32).reshape(1, dim)

    rt = _choose_row_tile(rows, dim, x.dtype, out_dtype, tile_budget_bytes,
                          num_cores, requested=row_tile)
    grid = (pl.cdiv(rows, rt),)

    if num_cores > 1:
        dim_sems = (pltpu.CORE_PARALLEL,)   # true per-core sharding on v7x
    else:
        dim_sems = ("parallel",)

    out2d = pl.pallas_call(
        functools.partial(_rmsnorm_kernel, eps=eps,
                          exact_dtype_rounding=exact_dtype_rounding),
        out_shape=jax.ShapeDtypeStruct((rows, dim), out_dtype),
        grid_spec=pltpu.PrefetchScalarGridSpec(
            num_scalar_prefetch=0,
            grid=grid,
            in_specs=[
                pl.BlockSpec((rt, dim), lambda i: (i, 0)),
                # Grid-invariant block index: weight is DMA'd once, not
                # re-fetched every step.
                pl.BlockSpec((1, dim), lambda i: (0, 0)),
            ],
            out_specs=pl.BlockSpec((rt, dim), lambda i: (i, 0)),
        ),
        compiler_params=pltpu.CompilerParams(
            dimension_semantics=dim_sems,
            vmem_limit_bytes=vmem_limit_bytes,
        ),
    )(x2d, w2d)

    return out2d.reshape(orig_shape)


def rmsnorm_ref(x, weight, eps=1e-5):
    x_f32 = x.astype(jnp.float32)
    variance = jnp.mean(x_f32 * x_f32, axis=-1, keepdims=True)
    normed = (x_f32 * jax.lax.rsqrt(variance + eps)).astype(x.dtype)
    return normed * weight


if __name__ == "__main__":
    key = jax.random.PRNGKey(0)
    k1, k2, k3 = jax.random.split(key, 3)

    # Case 1: typical (batch, seq, hidden) f32.
    batch, seq, hidden = 2, 8, 32
    x = jax.random.normal(k1, (batch, seq, hidden), dtype=jnp.float32)
    weight = jnp.ones((hidden,), dtype=jnp.float32)  # nn.Parameter(torch.ones(dim))
    out = jax.block_until_ready(rmsnorm(x, weight, eps=1e-5))
    ref = rmsnorm_ref(x, weight, eps=1e-5)
    assert out.shape == x.shape and out.dtype == ref.dtype
    assert jnp.allclose(out, ref, atol=1e-5, rtol=1e-5), "mismatch vs reference"

    # Case 2: leading dims whose product is not a multiple of the row tile
    # (exercises the ragged last grid block — no wrapper padding any more).
    x2 = jax.random.normal(k2, (3, 5, hidden), dtype=jnp.float32)
    out2 = jax.block_until_ready(rmsnorm(x2, weight, eps=1e-5))
    ref2 = rmsnorm_ref(x2, weight, eps=1e-5)
    assert out2.shape == x2.shape
    assert jnp.allclose(out2, ref2, atol=1e-5, rtol=1e-5), "mismatch (ragged rows)"

    # Case 3: bf16 activations, lane-dense hidden=128 (exercises sublane=16
    # alignment and the torch-promotion f32 output path).
    x3 = jax.random.normal(k3, (4, 16, 128), dtype=jnp.bfloat16)
    w3 = jnp.ones((128,), dtype=jnp.float32)
    out3 = jax.block_until_ready(rmsnorm(x3, w3, eps=1e-5))
    ref3 = rmsnorm_ref(x3, w3, eps=1e-5)
    assert out3.shape == x3.shape and out3.dtype == ref3.dtype
    assert jnp.allclose(out3, ref3, atol=3e-2, rtol=3e-2), "mismatch (bf16)"

    print("KERNEL_OK")
</pallas_src>

<mosaic_0001>
module attributes {stable_mosaic.version = 11 : i64} {
  func.func @_rmsnorm_kernel(%arg0: i32, %arg1: memref<16x32xf32, #tpu.memory_space<vmem>>, %arg2: memref<1x32xf32, #tpu.memory_space<vmem>>, %arg3: memref<16x32xf32, #tpu.memory_space<vmem>>) attributes {dimension_semantics = [#tpu.dimension_semantics<parallel>], iteration_bounds = array<i64: 1>, scalar_prefetch = 0 : i64, scratch_operands = 0 : i64, tpu.core_type = #tpu.core_type<tc>, window_params = [{transform_indices = @transform_0, window_bounds = array<i64: 16, 32>}, {pipeline_mode = #tpu.pipeline_mode<synchronous>, transform_indices = @transform_1, window_bounds = array<i64: 1, 32>}, {transform_indices = @transform_2, window_bounds = array<i64: 16, 32>}]} {
    %c0 = arith.constant 0 : index
    %c0_0 = arith.constant 0 : index
    %0 = vector.load %arg1[%c0, %c0_0] : memref<16x32xf32, #tpu.memory_space<vmem>>, vector<16x32xf32>
    %1 = arith.mulf %0, %0 : vector<16x32xf32>
    %cst = arith.constant dense<0.000000e+00> : vector<16xf32>
    %2 = vector.multi_reduction <add>, %1, %cst [1] : vector<16x32xf32> to vector<16xf32>
    %3 = vector.shape_cast %2 : vector<16xf32> to vector<16x1xf32>
    %cst_1 = arith.constant 3.200000e+01 : f32
    %4 = vector.broadcast %cst_1 : f32 to vector<16x1xf32>
    %5 = arith.divf %3, %4 : vector<16x1xf32>
    %cst_2 = arith.constant 9.99999974E-6 : f32
    %6 = vector.broadcast %cst_2 : f32 to vector<16x1xf32>
    %7 = arith.addf %5, %6 : vector<16x1xf32>
    %8 = math.rsqrt %7 : vector<16x1xf32>
    %9 = vector.broadcast %8 : vector<16x1xf32> to vector<16x32xf32>
    %10 = arith.mulf %0, %9 : vector<16x32xf32>
    %c0_3 = arith.constant 0 : index
    %c0_4 = arith.constant 0 : index
    %11 = vector.load %arg2[%c0_3, %c0_4] : memref<1x32xf32, #tpu.memory_space<vmem>>, vector<1x32xf32>
    %12 = vector.broadcast %11 : vector<1x32xf32> to vector<16x32xf32>
    %13 = arith.mulf %10, %12 : vector<16x32xf32>
    %c0_5 = arith.constant 0 : index
    %c0_6 = arith.constant 0 : index
    %14 = vector.load %arg3[%c0_5, %c0_6] : memref<16x32xf32, #tpu.memory_space<vmem>>, vector<16x32xf32>
    tpu.vector_store %arg3[%c0_5, %c0_6], %13 {strides = array<i32>} : memref<16x32xf32, #tpu.memory_space<vmem>>, vector<16x32xf32>,
    return
  }
  func.func @transform_0(%arg0: i32) -> (i32, i32) {
    %c0_i32 = arith.constant 0 : i32
    %c0_i32_0 = arith.constant 0 : i32
    return %arg0, %c0_i32 : i32, i32
  }
  func.func @transform_1(%arg0: i32) -> (i32, i32) {
    %c0_i32 = arith.constant 0 : i32
    %c0_i32_0 = arith.constant 0 : i32
    %c0_i32_1 = arith.constant 0 : i32
    return %c0_i32, %c0_i32_0 : i32, i32
  }
  func.func @transform_2(%arg0: i32) -> (i32, i32) {
    %c0_i32 = arith.constant 0 : i32
    %c0_i32_0 = arith.constant 0 : i32
    return %arg0, %c0_i32 : i32, i32
  }
}

</mosaic_0001>

<llo_original>
// kernel: tpu_custom_call.1
$region0: #{tpu_custom_call.1}
  #allocation0 [shape = 'u32[]', space=smem, size = 0x4, offset = 0x4, fixed_abs, tag = 'smem constant byte address 0x4 - core index']
  #allocation1 [shape = 'u32[144,128]{1,0:T(1,128)}', space=vmem, size = 0x12000, scoped, tag = 'internal scratch']
  %s0 = inlined_call_operand.hbm [shape: f32[16,32], index: 0, kind: input, shape index: {}]
  %s1 = inlined_call_operand.vmem [shape: f32[1,32], index: 1, kind: input, shape index: {}]
  %s2 = inlined_call_operand.hbm [shape: f32[16,32], index: 2, kind: output, shape index: {}]
  %s3 = sld [smem:[#allocation0]]
  $region22: #{tpu_custom_call.1} parent=0
    _
  %s5 = ssub.s32 1, %s3
  %s6 = scalar_select 0, %s5, %s3
  $region1: #{tpu_custom_call.1} parent=0
    #allocation2 [shape = 'u8[8192]{0}', space=vmem, size = 0x2000, scoped, tag = 'input window, operand 0, single buffered']
    #allocation3 [shape = 's32[1]{0}', space=sflag, size = 0x4, scoped, tag = 'scoped memory for tpu_custom_call.1']
    #allocation4 [shape = 's32[1]{0}', space=sflag, size = 0x4, scoped, tag = 'scoped memory for tpu_custom_call.1']
    #allocation5 [shape = 'u8[8192]{0}', space=vmem, size = 0x2000, scoped, tag = 'output window, operand 0, single buffered']
    %7 = vsyncpa [#allocation3], 0
    %8 = vsyncpa [#allocation4], 0
    // Predicated region
    $region2: #{tpu_custom_call.1} parent=1 // pred_check
      _
    $region3: #{tpu_custom_call.1} parent=1 // pred_check_branch
      %10 = sbr.rel (0) target = $region5
    $region4: #{tpu_custom_call.1} parent=1 // pred_region
      %s12 = ssub.s32 256, 256
      %13 = vsyncadd [#allocation3], %s12
      %s14 = sshll.u32 [#allocation2], 4
      %s15 = int_to_ptr.vmem [resolvable:$true] %s14
      %20 = dma.hbm_to_vmem [thread:$0]  %s0, 256, %s15, [#allocation3], 128, 128, 8
    $region5: #{tpu_custom_call.1} parent=1 // pred_fallthru
      _
    // Predicated region
    $region6: #{tpu_custom_call.1} parent=1 // pred_check
      _
    $region7: #{tpu_custom_call.1} parent=1 // pred_check_branch
      %22 = sbr.rel (0) target = $region9
    $region8: #{tpu_custom_call.1} parent=1 // pred_region
      _
    $region9: #{tpu_custom_call.1} parent=1 // pred_fallthru
      _
    // Predicated region
    $region10: #{tpu_custom_call.1} parent=1 // pred_check
      _
    $region11: #{tpu_custom_call.1} parent=1 // pred_check_branch
      %24 = sbr.rel (0) target = $region13
    $region12: #{tpu_custom_call.1} parent=1 // pred_region
      %25 = dma.done [#allocation3], 256
    $region13: #{tpu_custom_call.1} parent=1 // pred_fallthru
      _
    %v26 = vld [vmem:[#allocation2] sm:$0xff]
    %v27 = vld [vmem:[#allocation2 + $0x8] sm:$0xff]
    %v28 = vmul.f32 %v26, %v26
    %v29 = vmul.f32 %v27, %v27
    %vm30 = vcmask 261120
    %v31 = vsel %vm30, %v28, 0.0
    %32 = vadd.xlane.f32.xlu0 %v31
    %v33 = vpop.xlane.xlu0 %32
    %v34 = vsel %vm30, %v29, 0.0
    %35 = vadd.xlane.f32.xlu0 %v34
    %v36 = vpop.xlane.xlu0 %35
    %v37 = vrcp.pop 32.0
    %v38 = vmul.f32 %v33, %v37
    %v39 = vmul.f32 %v36, %v37
    %v40 = vadd.f32 %v38, 1e-05
    %v41 = vadd.f32 %v39, 1e-05
    %v42 = vrsqrt.pop %v40
    %v43 = vrsqrt.pop %v41
    %v44 = vmul.f32 %v26, %v42
    %v45 = vmul.f32 %v27, %v43
    %v46 = vld [vmem:[%s1] sm:$0x1]
    %v48 = vlaneseq
    %v49 = vshrl.u32 %v48, 7
    %v50 = vsub.s32 0, %v49
    %v51 = vrot.slane %v46, %v50
    %v53 = vmul.f32 %v44, %v51
    %v54 = vmul.f32 %v45, %v51
    %55 = vst.msk [vmem:[#allocation5] sm:$0xff] %vm30, %v53
    %56 = vst.msk [vmem:[#allocation5 + $0x8] sm:$0xff] %vm30, %v54
    // Predicated region
    $region14: #{tpu_custom_call.1} parent=1 // pred_check
      _
    $region15: #{tpu_custom_call.1} parent=1 // pred_check_branch
      %58 = sbr.rel (0) target = $region17
    $region16: #{tpu_custom_call.1} parent=1 // pred_region
      %s60 = ssub.s32 256, 256
      %61 = vsyncadd [#allocation4], %s60
      %s62 = sshll.u32 [#allocation5], 4
      %s63 = int_to_ptr.vmem [resolvable:$true] %s62
      %68 = dma.vmem_to_hbm [thread:$0]  %s63, 256, %s2, [#allocation4], 128, 128, 8
    $region17: #{tpu_custom_call.1} parent=1 // pred_fallthru
      _
    // Predicated region
    $region18: #{tpu_custom_call.1} parent=1 // pred_check
      _
    $region19: #{tpu_custom_call.1} parent=1 // pred_check_branch
      %70 = sbr.rel (0) target = $region21
    $region20: #{tpu_custom_call.1} parent=1 // pred_region
      %71 = dma.done [#allocation4], 256
    $region21: #{tpu_custom_call.1} parent=1 // pred_fallthru
      _
    %72 = vsyncpa [#allocation3], 1
    %73 = vsyncpa [#allocation4], 1

</llo_original>
